<compile_context>
chip_gen: v5e
topology: v5e:2x2
jax: 0.10.0
libtpu: 0.0.40
codegen_flags: <defaults>
</compile_context>

<pallas_src>
import functools

import jax
import jax.numpy as jnp
from jax.experimental import pallas as pl
from jax.experimental.pallas import tpu as pltpu

KSIZE = 5
PAD = 2
OUT_CH = 16
K_TAPS = KSIZE ** 3                     # 125 conv taps
K_PADDED = 128                          # taps padded to a full lane tile
CENTER_TAP = 2 * 25 + 2 * 5 + 2         # 62: the kd=kh=kw=2 tap == raw x


def _stats_kernel(pt_ref, w_ref, sum_ref, sqsum_ref):
    """Pass 1: accumulate per-channel sum / sum-of-squares of the conv output."""
    @pl.when(pl.program_id(0) == 0)
    def _init():
        sum_ref[...] = jnp.zeros_like(sum_ref)
        sqsum_ref[...] = jnp.zeros_like(sqsum_ref)

    conv = jnp.dot(w_ref[...], pt_ref[...],
                   preferred_element_type=jnp.float32)          # (16, TM) f32
    sum_ref[...] += jnp.sum(conv, axis=1, keepdims=True)        # (16, 1)
    sqsum_ref[...] += jnp.sum(conv * conv, axis=1, keepdims=True)


def _epilogue_kernel(pt_ref, w_ref, sum_ref, sqsum_ref, gamma_ref, beta_ref,
                     alpha_ref, out_ref, *, inv_m, eps, use_elu):
    """Pass 2: conv -> BN (folded scale/shift) -> +residual -> ELU/PReLU."""
    conv = jnp.dot(w_ref[...], pt_ref[...],
                   preferred_element_type=jnp.float32)          # (16, TM) f32

    mean = sum_ref[...] * inv_m                                  # (16, 1)
    var = sqsum_ref[...] * inv_m - mean * mean                   # biased var
    scale = gamma_ref[...] * jax.lax.rsqrt(var + eps)
    shift = beta_ref[...] - mean * scale

    # Residual x is exactly the center tap row of the patch matrix.
    resid = pt_ref[CENTER_TAP:CENTER_TAP + 1, :].astype(jnp.float32)  # (1, TM)

    v = conv * scale + shift + resid
    if use_elu:
        act = jnp.where(v > 0, v, jnp.exp(jnp.minimum(v, 0.0)) - 1.0)
    else:
        act = jnp.where(v >= 0, v, alpha_ref[...] * v)
    out_ref[...] = act                                           # lane-dense


def _im2col_T(x3_bf16, D, H, W, m_pad):
    """(N, D, H, W) bf16 -> (128, M_pad) bf16 patch matrix, taps on sublanes."""
    xpad = jnp.pad(x3_bf16, ((0, 0), (PAD, PAD), (PAD, PAD), (PAD, PAD)))
    cols = [xpad[:, kd:kd + D, kh:kh + H, kw:kw + W].reshape(-1)
            for kd in range(KSIZE) for kh in range(KSIZE) for kw in range(KSIZE)]
    pt = jnp.stack(cols, axis=0)                                 # (125, M)
    M = pt.shape[1]
    return jnp.pad(pt, ((0, K_PADDED - K_TAPS), (0, m_pad - M)))


def input_transition_forward(x, params, *, elu=True, eps=1e-5, tile_m=2048):
    """x: (N, 1, D, H, W) float32 (PyTorch NCDHW). Returns (N, 16, D, H, W)."""
    N, C, D, H, W = x.shape
    assert C == 1, "InputTransition expects a single input channel"
    M = N * D * H * W

    TM = min(tile_m, ((M + 127) // 128) * 128)     # lane-aligned tile over M
    n_tiles = (M + TM - 1) // TM
    M_pad = n_tiles * TM                           # zero cols add 0 to stats

    x3 = x[:, 0].astype(jnp.bfloat16)
    pt = _im2col_T(x3, D, H, W, M_pad)                           # (128, M_pad)

    # conv bias is dropped: with training-mode BN it cancels exactly.
    wt = params["conv_w"].reshape(OUT_CH, K_TAPS)
    wt = jnp.pad(wt, ((0, 0), (0, K_PADDED - K_TAPS))).astype(jnp.bfloat16)
    gamma = params["bn_gamma"].reshape(OUT_CH, 1).astype(jnp.float32)
    beta = params["bn_beta"].reshape(OUT_CH, 1).astype(jnp.float32)
    alpha = params["prelu_a"].reshape(OUT_CH, 1).astype(jnp.float32)

    pt_spec = pl.BlockSpec((K_PADDED, TM), lambda i: (0, i))
    w_spec = pl.BlockSpec((OUT_CH, K_PADDED), lambda i: (0, 0))
    vec_spec = pl.BlockSpec((OUT_CH, 1), lambda i: (0, 0))

    # Pass 1: global per-channel sum / sum-of-squares (accumulator outputs,
    # resident across the sequential "arbitrary" grid axis).
    sums, sqsums = pl.pallas_call(
        _stats_kernel,
        out_shape=(jax.ShapeDtypeStruct((OUT_CH, 1), jnp.float32),
                   jax.ShapeDtypeStruct((OUT_CH, 1), jnp.float32)),
        grid=(n_tiles,),
        in_specs=[pt_spec, w_spec],
        out_specs=(vec_spec, vec_spec),
        compiler_params=pltpu.CompilerParams(
            dimension_semantics=("arbitrary",)),
    )(pt, wt)

    # Pass 2: independent tiles -> "parallel" (feeds both v7x TensorCores).
    out2d = pl.pallas_call(
        functools.partial(_epilogue_kernel, inv_m=1.0 / M, eps=eps,
                          use_elu=elu),
        out_shape=jax.ShapeDtypeStruct((OUT_CH, M_pad), jnp.float32),
        grid=(n_tiles,),
        in_specs=[pt_spec, w_spec, vec_spec, vec_spec,
                  vec_spec, vec_spec, vec_spec],
        out_specs=pl.BlockSpec((OUT_CH, TM), lambda i: (0, i)),
        compiler_params=pltpu.CompilerParams(
            dimension_semantics=("parallel",)),
    )(pt, wt, sums, sqsums, gamma, beta, alpha)

    # (16, M) -> (16, N, D, H, W) -> NCDHW to match PyTorch.
    out = out2d[:, :M].reshape(OUT_CH, N, D, H, W)
    return jnp.transpose(out, (1, 0, 2, 3, 4))


def _reference_forward(x, params, *, elu=True, eps=1e-5):
    """Pure-JAX reference. Mirrors the kernel's bf16 quantization of the MXU
    inputs (f32 accumulation / epilogue) so the comparison is apples-to-apples."""
    xq = x.astype(jnp.bfloat16).astype(jnp.float32)
    wq = params["conv_w"].astype(jnp.bfloat16).astype(jnp.float32)
    conv = jax.lax.conv_general_dilated(
        xq, wq, window_strides=(1, 1, 1), padding=((PAD, PAD),) * 3,
        dimension_numbers=("NCDHW", "OIDHW", "NCDHW"),
        precision=jax.lax.Precision.HIGHEST)
    conv = conv + params["conv_b"].reshape(1, OUT_CH, 1, 1, 1)
    mean = conv.mean(axis=(0, 2, 3, 4), keepdims=True)
    var = ((conv - mean) ** 2).mean(axis=(0, 2, 3, 4), keepdims=True)
    bn = (conv - mean) * jax.lax.rsqrt(var + eps)
    bn = bn * params["bn_gamma"].reshape(1, OUT_CH, 1, 1, 1) \
         + params["bn_beta"].reshape(1, OUT_CH, 1, 1, 1)
    v = bn + xq
    if elu:
        return jnp.where(v > 0, v, jnp.exp(jnp.minimum(v, 0.0)) - 1.0)
    return jnp.where(v >= 0, v,
                     params["prelu_a"].reshape(1, OUT_CH, 1, 1, 1) * v)


if __name__ == "__main__":
    key = jax.random.PRNGKey(0)
    kx, kw, kb, kg, kbe = jax.random.split(key, 5)

    N, D, H, W = 2, 16, 16, 16
    x = jax.random.normal(kx, (N, 1, D, H, W), dtype=jnp.float32)

    params = {
        "conv_w": 0.1 * jax.random.normal(
            kw, (OUT_CH, 1, KSIZE, KSIZE, KSIZE), dtype=jnp.float32),
        "conv_b": 0.1 * jax.random.normal(kb, (OUT_CH,), dtype=jnp.float32),
        "bn_gamma": 1.0 + 0.1 * jax.random.normal(kg, (OUT_CH,),
                                                  dtype=jnp.float32),
        "bn_beta": 0.1 * jax.random.normal(kbe, (OUT_CH,), dtype=jnp.float32),
        "prelu_a": jnp.full((OUT_CH,), 0.25, dtype=jnp.float32),  # if elu=False
    }

    out = jax.block_until_ready(input_transition_forward(x, params, elu=True))
    ref = _reference_forward(x, params, elu=True)

    assert out.shape == (N, OUT_CH, D, H, W), out.shape
    if not jnp.allclose(out, ref, rtol=2e-3, atol=2e-3):
        raise AssertionError(
            f"mismatch vs reference, max abs err = {jnp.max(jnp.abs(out - ref))}")
    print("KERNEL_OK")
</pallas_src>

<mosaic_0001>
module attributes {stable_mosaic.version = 11 : i64} {
  func.func @_stats_kernel(%arg0: i32, %arg1: memref<128x2048xbf16, #tpu.memory_space<vmem>>, %arg2: memref<16x128xbf16, #tpu.memory_space<vmem>>, %arg3: memref<16x1xf32, #tpu.memory_space<vmem>>, %arg4: memref<16x1xf32, #tpu.memory_space<vmem>>) attributes {dimension_semantics = [#tpu.dimension_semantics<arbitrary>], iteration_bounds = array<i64: 4>, scalar_prefetch = 0 : i64, scratch_operands = 0 : i64, tpu.core_type = #tpu.core_type<tc>, window_params = [{transform_indices = @transform_0, window_bounds = array<i64: 128, 2048>}, {pipeline_mode = #tpu.pipeline_mode<synchronous>, transform_indices = @transform_1, window_bounds = array<i64: 16, 128>}, {pipeline_mode = #tpu.pipeline_mode<synchronous>, transform_indices = @transform_2, window_bounds = array<i64: 16, 1>}, {pipeline_mode = #tpu.pipeline_mode<synchronous>, transform_indices = @transform_3, window_bounds = array<i64: 16, 1>}]} {
    %c0_i32 = arith.constant 0 : i32
    %0 = arith.cmpi eq, %arg0, %c0_i32 : i32
    %1 = arith.extui %0 : i1 to i32
    %c0_i32_0 = arith.constant 0 : i32
    %2 = arith.cmpi ne, %1, %c0_i32_0 : i32
    scf.if %2 {
      %cst_14 = arith.constant 0.000000e+00 : f32
      %17 = vector.broadcast %cst_14 : f32 to vector<16x1xf32>
      %c0_15 = arith.constant 0 : index
      %c0_16 = arith.constant 0 : index
      %18 = vector.load %arg3[%c0_15, %c0_16] : memref<16x1xf32, #tpu.memory_space<vmem>>, vector<16x1xf32>
      tpu.vector_store %arg3[%c0_15, %c0_16], %17 {strides = array<i32>} : memref<16x1xf32, #tpu.memory_space<vmem>>, vector<16x1xf32>,
      %cst_17 = arith.constant 0.000000e+00 : f32
      %19 = vector.broadcast %cst_17 : f32 to vector<16x1xf32>
      %c0_18 = arith.constant 0 : index
      %c0_19 = arith.constant 0 : index
      %20 = vector.load %arg4[%c0_18, %c0_19] : memref<16x1xf32, #tpu.memory_space<vmem>>, vector<16x1xf32>
      tpu.vector_store %arg4[%c0_18, %c0_19], %19 {strides = array<i32>} : memref<16x1xf32, #tpu.memory_space<vmem>>, vector<16x1xf32>,
    } else {
    }
    %c0 = arith.constant 0 : index
    %c0_1 = arith.constant 0 : index
    %3 = vector.load %arg2[%c0, %c0_1] : memref<16x128xbf16, #tpu.memory_space<vmem>>, vector<16x128xbf16>
    %c0_2 = arith.constant 0 : index
    %c0_3 = arith.constant 0 : index
    %4 = vector.load %arg1[%c0_2, %c0_3] : memref<128x2048xbf16, #tpu.memory_space<vmem>>, vector<128x2048xbf16>
    %cst = arith.constant dense<0.000000e+00> : vector<16x2048xf32>
    %5 = tpu.matmul %3, %4, %cst {dimension_numbers = #tpu.dot_dimension_numbers<[1], [0], [0], [1], [0, 0, 1, 1], [], []>} : vector<16x128xbf16>, vector<128x2048xbf16>, vector<16x2048xf32> -> vector<16x2048xf32>
    %c0_4 = arith.constant 0 : index
    %c0_5 = arith.constant 0 : index
    %6 = vector.load %arg3[%c0_4, %c0_5] : memref<16x1xf32, #tpu.memory_space<vmem>>, vector<16x1xf32>
    %cst_6 = arith.constant dense<0.000000e+00> : vector<16xf32>
    %7 = vector.multi_reduction <add>, %5, %cst_6 [1] : vector<16x2048xf32> to vector<16xf32>
    %8 = vector.shape_cast %7 : vector<16xf32> to vector<16x1xf32>
    %9 = arith.addf %6, %8 : vector<16x1xf32>
    %c0_7 = arith.constant 0 : index
    %c0_8 = arith.constant 0 : index
    %10 = vector.load %arg3[%c0_7, %c0_8] : memref<16x1xf32, #tpu.memory_space<vmem>>, vector<16x1xf32>
    tpu.vector_store %arg3[%c0_7, %c0_8], %9 {strides = array<i32>} : memref<16x1xf32, #tpu.memory_space<vmem>>, vector<16x1xf32>,
    %c0_9 = arith.constant 0 : index
    %c0_10 = arith.constant 0 : index
    %11 = vector.load %arg4[%c0_9, %c0_10] : memref<16x1xf32, #tpu.memory_space<vmem>>, vector<16x1xf32>
    %12 = arith.mulf %5, %5 : vector<16x2048xf32>
    %cst_11 = arith.constant dense<0.000000e+00> : vector<16xf32>
    %13 = vector.multi_reduction <add>, %12, %cst_11 [1] : vector<16x2048xf32> to vector<16xf32>
    %14 = vector.shape_cast %13 : vector<16xf32> to vector<16x1xf32>
    %15 = arith.addf %11, %14 : vector<16x1xf32>
    %c0_12 = arith.constant 0 : index
    %c0_13 = arith.constant 0 : index
    %16 = vector.load %arg4[%c0_12, %c0_13] : memref<16x1xf32, #tpu.memory_space<vmem>>, vector<16x1xf32>
    tpu.vector_store %arg4[%c0_12, %c0_13], %15 {strides = array<i32>} : memref<16x1xf32, #tpu.memory_space<vmem>>, vector<16x1xf32>,
    return
  }
  func.func @transform_0(%arg0: i32) -> (i32, i32) {
    %c0_i32 = arith.constant 0 : i32
    %c0_i32_0 = arith.constant 0 : i32
    return %c0_i32, %arg0 : i32, i32
  }
  func.func @transform_1(%arg0: i32) -> (i32, i32) {
    %c0_i32 = arith.constant 0 : i32
    %c0_i32_0 = arith.constant 0 : i32
    %c0_i32_1 = arith.constant 0 : i32
    return %c0_i32, %c0_i32_0 : i32, i32
  }
  func.func @transform_2(%arg0: i32) -> (i32, i32) {
    %c0_i32 = arith.constant 0 : i32
    %c0_i32_0 = arith.constant 0 : i32
    %c0_i32_1 = arith.constant 0 : i32
    return %c0_i32, %c0_i32_0 : i32, i32
  }
  func.func @transform_3(%arg0: i32) -> (i32, i32) {
    %c0_i32 = arith.constant 0 : i32
    %c0_i32_0 = arith.constant 0 : i32
    %c0_i32_1 = arith.constant 0 : i32
    return %c0_i32, %c0_i32_0 : i32, i32
  }
}

</mosaic_0001>

<llo_original>
// kernel: tpu_custom_call.1
$region0: #{tpu_custom_call.1}
  #allocation0 [shape = 'u32[]', space=smem, size = 0x4, offset = 0x4, fixed_abs, tag = 'smem constant byte address 0x4 - core index']
  #allocation1 [shape = 'u32[72,128]{1,0:T(1,128)}', space=vmem, size = 0x9000, scoped, tag = 'internal scratch']
  %s0 = inlined_call_operand.hbm [shape: bf16[128,8192], index: 0, kind: input, shape index: {}]
  %s1 = inlined_call_operand.hbm [shape: bf16[16,128], index: 1, kind: input, shape index: {}]
  %s2 = inlined_call_operand.vmem [shape: f32[16,1], index: 2, kind: output, shape index: {0}]
  %s3 = inlined_call_operand.vmem [shape: f32[16,1], index: 3, kind: output, shape index: {1}]
  %4 = xla_tuple %s2, %s3
  %s5 = sld [smem:[#allocation0]]
  $region61: #{tpu_custom_call.1} parent=0
    _
  %s7 = ssub.s32 1, %s5
  %s8 = scalar_select 0, %s7, %s5
  $region1: #{tpu_custom_call.1} parent=0
    #allocation2 [shape = 'u8[1048576]{0}', space=vmem, size = 0x100000, scoped, tag = 'input window, operand 0']
    #allocation3 [shape = 's32[2]{0}', space=sflag, size = 0x8, scoped, tag = 'scoped memory for tpu_custom_call.1']
    #allocation4 [shape = 'u8[4096]{0}', space=vmem, size = 0x1000, scoped, tag = 'input window, operand 1, single buffered']
    #allocation5 [shape = 's32[1]{0}', space=sflag, size = 0x4, scoped, tag = 'scoped memory for tpu_custom_call.1']
    %9 = vsyncpa [#allocation3], 0
    %s10 = scalar_lea.sflag [#allocation3], 1
    %11 = vsyncpa %s10, 0
    %12 = vsyncpa [#allocation5], 0
    loop: start=0, step=1, limit=6
    $region2: #{tpu_custom_call.1} parent=1 // loop_pre_header
      _
    $region3: #{tpu_custom_call.1} parent=1 // loop_header
      %s14 = sphi 0, %s18
      %p15 = scmp.ge.s32.totalorder %s14, 6
      %s24 = sphi 0, %s26
      %s27 = sphi 0, %s24
      %s28 = sphi 0, %s27
      %s44 = sphi 0, %s28
      %s48 = sphi 0, %s48
      %s50 = sphi 0, %s48
      %s51 = sphi 0, %s50
      %s65 = sphi 0, %s51
      %s69 = sphi 0, %s69
      %s71 = sphi 0, %s69
      %s72 = sphi 0, %s71
      %s86 = sphi 0, %s72
      %s90 = sphi 0, %s90
      %s92 = sphi 0, %s90
      %s93 = sphi 0, %s92
      %s107 = sphi 0, %s93
    $region4: #{tpu_custom_call.1} parent=1 // loop_header_branch
      %17 = sbr.rel (%p15) target = $region8
    $region5: #{tpu_custom_call.1} parent=1 // loop_body
      %s19 = ssub.s32 %s14, 1
      %s20 = ssub.s32 %s14, 2
      %s21 = sadd.s32 %s14, 1
      %s22 = ssub.s32 %s14, %s21
      %p23 = scmp.eq.s32.totalorder %s22, 0
      %s25 = sadd.s32 %s24, 1
      %s26 = scalar_select %p23, %s24, %s25
      %p29 = pneg %p23
      %p30 = scmp.eq.s32.totalorder %s14, 3
      %p31 = por %p29, %p30
      %p32 = scmp.ne.s32.totalorder %s24, %s27
      %p33 = scmp.eq.s32.totalorder %s14, 0
      %p34 = por %p32, %p33
      %p35 = scmp.ne.s32.totalorder %s24, %s27
      %p36 = scmp.eq.s32.totalorder %s19, 3
      %p37 = por %p35, %p36
      %p38 = scmp.ne.s32.totalorder %s27, %s28
      %p39 = scmp.eq.s32.totalorder %s19, 0
      %p40 = por %p38, %p39
      %p41 = scmp.ne.s32.totalorder %s27, %s28
      %p42 = scmp.eq.s32.totalorder %s20, 3
      %p43 = por %p41, %p42
      %p45 = scmp.ne.s32.totalorder %s28, %s44
      %p46 = scmp.eq.s32.totalorder %s20, 0
      %p47 = por %p45, %p46
      %s49 = sadd.s32 %s48, 1
      %p52 = scmp.eq.s32.totalorder %s14, 3
      %p53 = scmp.ne.s32.totalorder %s48, %s50
      %p54 = scmp.eq.s32.totalorder %s14, 0
      %p55 = por %p53, %p54
      %p56 = scmp.ne.s32.totalorder %s48, %s50
      %p57 = scmp.eq.s32.totalorder %s19, 3
      %p58 = por %p56, %p57
      %p59 = scmp.ne.s32.totalorder %s50, %s51
      %p60 = scmp.eq.s32.totalorder %s19, 0
      %p61 = por %p59, %p60
      %p62 = scmp.ne.s32.totalorder %s50, %s51
      %p63 = scmp.eq.s32.totalorder %s20, 3
      %p64 = por %p62, %p63
      %p66 = scmp.ne.s32.totalorder %s51, %s65
      %p67 = scmp.eq.s32.totalorder %s20, 0
      %p68 = por %p66, %p67
      %s70 = sadd.s32 %s69, 1
      %p73 = scmp.eq.s32.totalorder %s14, 3
      %p74 = scmp.ne.s32.totalorder %s69, %s71
      %p75 = scmp.eq.s32.totalorder %s14, 0
      %p76 = por %p74, %p75
      %p77 = scmp.ne.s32.totalorder %s69, %s71
      %p78 = scmp.eq.s32.totalorder %s19, 3
      %p79 = por %p77, %p78
      %p80 = scmp.ne.s32.totalorder %s71, %s72
      %p81 = scmp.eq.s32.totalorder %s19, 0
      %p82 = por %p80, %p81
      %p83 = scmp.ne.s32.totalorder %s71, %s72
      %p84 = scmp.eq.s32.totalorder %s20, 3
      %p85 = por %p83, %p84
      %p87 = scmp.ne.s32.totalorder %s72, %s86
      %p88 = scmp.eq.s32.totalorder %s20, 0
      %p89 = por %p87, %p88
      %s91 = sadd.s32 %s90, 1
      %p94 = scmp.eq.s32.totalorder %s14, 3
      %p95 = scmp.ne.s32.totalorder %s90, %s92
      %p96 = scmp.eq.s32.totalorder %s14, 0
      %p97 = por %p95, %p96
      %p98 = scmp.ne.s32.totalorder %s90, %s92
      %p99 = scmp.eq.s32.totalorder %s19, 3
      %p100 = por %p98, %p99
      %p101 = scmp.ne.s32.totalorder %s92, %s93
      %p102 = scmp.eq.s32.totalorder %s19, 0
      %p103 = por %p101, %p102
      %p104 = scmp.ne.s32.totalorder %s92, %s93
      %p105 = scmp.eq.s32.totalorder %s20, 3
      %p106 = por %p104, %p105
      %p108 = scmp.ne.s32.totalorder %s93, %s107
      %p109 = scmp.eq.s32.totalorder %s20, 0
      %p110 = por %p108, %p109
      %p111 = scmp.le.s32.totalorder 1, %s14
      %p112 = scmp.lt.s32.totalorder %s14, 5
      %p113 = pnand %p111, %p112
      %p114 = pneg %p113
      // Predicated region
      $region9: #{tpu_custom_call.1} parent=5 // pred_check
        _
      $region10: #{tpu_custom_call.1} parent=5 // pred_check_branch
        %116 = sbr.rel (%p113) target = $region12
      $region11: #{tpu_custom_call.1} parent=5 // pred_region
        %s117 = ssub.s32 %s14, 1
        // Predicated region
        $region13: #{tpu_custom_call.1} parent=11 // pred_check
          %p118 = pneg %p61
        $region14: #{tpu_custom_call.1} parent=11 // pred_check_branch
          %120 = sbr.rel (%p118) target = $region16
        $region15: #{tpu_custom_call.1} parent=11 // pred_region
          %122 = vsyncadd [#allocation5], 0
          %s123 = sshll.u32 %s1, 4
          %s124 = int_to_ptr.hbm [resolvable:$true] %s123
          %s125 = sshll.u32 [#allocation4], 4
          %s126 = int_to_ptr.vmem [resolvable:$true] %s125
          %131 = dma.hbm_to_vmem [thread:$0]  %s124, 128, %s126, [#allocation5], 64, 64, 4
        $region16: #{tpu_custom_call.1} parent=11 // pred_fallthru
          _
      $region12: #{tpu_custom_call.1} parent=5 // pred_fallthru
        _
      %p132 = scmp.lt.s32.totalorder %s14, 4
      // Predicated region
      $region17: #{tpu_custom_call.1} parent=5 // pred_check
        %p133 = pneg %p132
      $region18: #{tpu_custom_call.1} parent=5 // pred_check_branch
        %135 = sbr.rel (%p133) target = $region20
      $region19: #{tpu_custom_call.1} parent=5 // pred_region
        // Predicated region
        $region21: #{tpu_custom_call.1} parent=19 // pred_check
          %p136 = pneg %p34
        $region22: #{tpu_custom_call.1} parent=19 // pred_check_branch
          %138 = sbr.rel (%p136) target = $region24
        $region23: #{tpu_custom_call.1} parent=19 // pred_region
          %s139 = sand.u32 %s24, 1
          %s140 = scalar_lea.sflag [#allocation3], %s139
          %s141 = sand.u32 %s24, 1
          %s142 = smul.addr %s141, 1024
          %s143 = scalar_lea.vmem [#allocation2], %s142
          %s144 = smul.u32 16, %s14
          %146 = vsyncadd %s140, 0
          %s147 = smul.addr %s144, 4
          %s148 = scalar_lea.hbm %s0, %s147
          %s149 = sshll.u32 %s148, 4
          %s150 = int_to_ptr.hbm [resolvable:$true] %s149
          %s151 = sshll.u32 %s143, 4
          %s152 = int_to_ptr.vmem [resolvable:$true] %s151
          %157 = dma.hbm_to_vmem [thread:$0]  %s150, 16384, %s152, %s140, 4096, 1024, 64
        $region24: #{tpu_custom_call.1} parent=19 // pred_fallthru
          _
      $region20: #{tpu_custom_call.1} parent=5 // pred_fallthru
        _
      %p158 = scmp.le.s32.totalorder 1, %s14
      %p159 = scmp.lt.s32.totalorder %s14, 5
      %p160 = pnand %p158, %p159
      %p161 = pneg %p160
      // Predicated region
      $region25: #{tpu_custom_call.1} parent=5 // pred_check
        _
      $region26: #{tpu_custom_call.1} parent=5 // pred_check_branch
        %163 = sbr.rel (%p160) target = $region28
      $region27: #{tpu_custom_call.1} parent=5 // pred_region
        %s164 = ssub.s32 %s14, 1
        %s165 = sand.u32 %s27, 1
        %s166 = scalar_lea.sflag [#allocation3], %s165
        %s167 = sand.u32 %s27, 1
        %s168 = smul.addr %s167, 1024
        %s169 = scalar_lea.vmem [#allocation2], %s168
        // Predicated region
        $region29: #{tpu_custom_call.1} parent=27 // pred_check
          %p170 = pneg %p40
        $region30: #{tpu_custom_call.1} parent=27 // pred_check_branch
          %172 = sbr.rel (%p170) target = $region32
        $region31: #{tpu_custom_call.1} parent=27 // pred_region
          %174 = dma.done %s166, 16384
        $region32: #{tpu_custom_call.1} parent=27 // pred_fallthru
          _
        // Predicated region
        $region33: #{tpu_custom_call.1} parent=27 // pred_check
          %p175 = pneg %p61
        $region34: #{tpu_custom_call.1} parent=27 // pred_check_branch
          %177 = sbr.rel (%p175) target = $region36
        $region35: #{tpu_custom_call.1} parent=27 // pred_region
          %179 = dma.done [#allocation5], 128
        $region36: #{tpu_custom_call.1} parent=27 // pred_fallthru
          _
        %s180 = sand.u32 %s27, 1
        %s181 = scalar_lea.sflag [#allocation3], %s180
        %s182 = sand.u32 %s27, 1
        %s183 = smul.addr %s182, 1024
        %s184 = scalar_lea.vmem [#allocation2], %s183
        %p185 = pneg %p40
        %p186 = pneg %p37
        %p187 = pneg %p61
        %p188 = pneg %p58
        %p189 = pneg %p82
        %p190 = pneg %p79
        %p191 = pneg %p103
        %p192 = pneg %p100
        %s193 = smul.u32 16, %s19
        %p194 = scmp.eq.s32.totalorder %s19, 0
        // Predicated region
        $region37: #{tpu_custom_call.1} parent=27 // pred_check
          %p195 = pneg %p194
        $region38: #{tpu_custom_call.1} parent=27 // pred_check_branch
          %197 = sbr.rel (%p195) target = $region40
        $region39: #{tpu_custom_call.1} parent=27 // pred_region
          %vm198 = vcmask 7168
          %199 = vst.msk [vmem:[%s2] sm:$0xff] %vm198, 0.0
          %200 = vst.msk [vmem:[%s2 + $0x8] sm:$0xff] %vm198, 0.0
          %201 = vst.msk [vmem:[%s3] sm:$0xff] %vm198, 0.0
          %202 = vst.msk [vmem:[%s3 + $0x8] sm:$0xff] %vm198, 0.0
        $region40: #{tpu_custom_call.1} parent=27 // pred_fallthru
          _
        %v203 = vld [vmem:[#allocation4] sm:$0xf]
        %v204 = vld [vmem:[#allocation4 + $0x4] sm:$0xf]
        %v205 = vld [vmem:[%s169] sm:$0xff]
        %v206 = vld [vmem:[%s169 + $0x8] sm:$0xff]
        %v207 = vld [vmem:[%s169 + $0x10] sm:$0xff]
        %v208 = vld [vmem:[%s169 + $0x18] sm:$0xff]
        %v209 = vld [vmem:[%s169 + $0x20] sm:$0xff]
        %v210 = vld [vmem:[%s169 + $0x28] sm:$0xff]
        %v211 = vld [vmem:[%s169 + $0x30] sm:$0xff]
        %v212 = vld [vmem:[%s169 + $0x38] sm:$0xff]
        %v213 = vld [vmem:[%s169 + $0x40] sm:$0xff]
        %v214 = vld [vmem:[%s169 + $0x48] sm:$0xff]
        %v215 = vld [vmem:[%s169 + $0x50] sm:$0xff]
        %v216 = vld [vmem:[%s169 + $0x58] sm:$0xff]
        %v217 = vld [vmem:[%s169 + $0x60] sm:$0xff]
        %v218 = vld [vmem:[%s169 + $0x68] sm:$0xff]
        %v219 = vld [vmem:[%s169 + $0x70] sm:$0xff]
        %v220 = vld [vmem:[%s169 + $0x78] sm:$0xff]
        %v221 = vld [vmem:[%s169 + $0x80] sm:$0xff]
        %v222 = vld [vmem:[%s169 + $0x88] sm:$0xff]
        %v223 = vld [vmem:[%s169 + $0x90] sm:$0xff]
        %v224 = vld [vmem:[%s169 + $0x98] sm:$0xff]
        %v225 = vld [vmem:[%s169 + $0xa0] sm:$0xff]
        %v226 = vld [vmem:[%s169 + $0xa8] sm:$0xff]
        %v227 = vld [vmem:[%s169 + $0xb0] sm:$0xff]
        %v228 = vld [vmem:[%s169 + $0xb8] sm:$0xff]
        %v229 = vld [vmem:[%s169 + $0xc0] sm:$0xff]
        %v230 = vld [vmem:[%s169 + $0xc8] sm:$0xff]
        %v231 = vld [vmem:[%s169 + $0xd0] sm:$0xff]
        %v232 = vld [vmem:[%s169 + $0xd8] sm:$0xff]
        %v233 = vld [vmem:[%s169 + $0xe0] sm:$0xff]
        %v234 = vld [vmem:[%s169 + $0xe8] sm:$0xff]
        %v235 = vld [vmem:[%s169 + $0xf0] sm:$0xff]
        %v236 = vld [vmem:[%s169 + $0xf8] sm:$0xff]
        %v237 = vld [vmem:[%s169 + $0x100] sm:$0xff]
        %v238 = vld [vmem:[%s169 + $0x108] sm:$0xff]
        %v239 = vld [vmem:[%s169 + $0x110] sm:$0xff]
        %v240 = vld [vmem:[%s169 + $0x118] sm:$0xff]
        %v241 = vld [vmem:[%s169 + $0x120] sm:$0xff]
        %v242 = vld [vmem:[%s169 + $0x128] sm:$0xff]
        %v243 = vld [vmem:[%s169 + $0x130] sm:$0xff]
        %v244 = vld [vmem:[%s169 + $0x138] sm:$0xff]
        %v245 = vld [vmem:[%s169 + $0x140] sm:$0xff]
        %v246 = vld [vmem:[%s169 + $0x148] sm:$0xff]
        %v247 = vld [vmem:[%s169 + $0x150] sm:$0xff]
        %v248 = vld [vmem:[%s169 + $0x158] sm:$0xff]
        %v249 = vld [vmem:[%s169 + $0x160] sm:$0xff]
        %v250 = vld [vmem:[%s169 + $0x168] sm:$0xff]
        %v251 = vld [vmem:[%s169 + $0x170] sm:$0xff]
        %v252 = vld [vmem:[%s169 + $0x178] sm:$0xff]
        %v253 = vld [vmem:[%s169 + $0x180] sm:$0xff]
        %v254 = vld [vmem:[%s169 + $0x188] sm:$0xff]
        %v255 = vld [vmem:[%s169 + $0x190] sm:$0xff]
        %v256 = vld [vmem:[%s169 + $0x198] sm:$0xff]
        %v257 = vld [vmem:[%s169 + $0x1a0] sm:$0xff]
        %v258 = vld [vmem:[%s169 + $0x1a8] sm:$0xff]
        %v259 = vld [vmem:[%s169 + $0x1b0] sm:$0xff]
        %v260 = vld [vmem:[%s169 + $0x1b8] sm:$0xff]
        %v261 = vld [vmem:[%s169 + $0x1c0] sm:$0xff]
        %v262 = vld [vmem:[%s169 + $0x1c8] sm:$0xff]
        %v263 = vld [vmem:[%s169 + $0x1d0] sm:$0xff]
        %v264 = vld [vmem:[%s169 + $0x1d8] sm:$0xff]
        %v265 = vld [vmem:[%s169 + $0x1e0] sm:$0xff]
        %v266 = vld [vmem:[%s169 + $0x1e8] sm:$0xff]
        %v267 = vld [vmem:[%s169 + $0x1f0] sm:$0xff]
        %v268 = vld [vmem:[%s169 + $0x1f8] sm:$0xff]
        %v269 = vld [vmem:[%s169 + $0x200] sm:$0xff]
        %v270 = vld [vmem:[%s169 + $0x208] sm:$0xff]
        %v271 = vld [vmem:[%s169 + $0x210] sm:$0xff]
        %v272 = vld [vmem:[%s169 + $0x218] sm:$0xff]
        %v273 = vld [vmem:[%s169 + $0x220] sm:$0xff]
        %v274 = vld [vmem:[%s169 + $0x228] sm:$0xff]
        %v275 = vld [vmem:[%s169 + $0x230] sm:$0xff]
        %v276 = vld [vmem:[%s169 + $0x238] sm:$0xff]
        %v277 = vld [vmem:[%s169 + $0x240] sm:$0xff]
        %v278 = vld [vmem:[%s169 + $0x248] sm:$0xff]
        %v279 = vld [vmem:[%s169 + $0x250] sm:$0xff]
        %v280 = vld [vmem:[%s169 + $0x258] sm:$0xff]
        %v281 = vld [vmem:[%s169 + $0x260] sm:$0xff]
        %v282 = vld [vmem:[%s169 + $0x268] sm:$0xff]
        %v283 = vld [vmem:[%s169 + $0x270] sm:$0xff]
        %v284 = vld [vmem:[%s169 + $0x278] sm:$0xff]
        %v285 = vld [vmem:[%s169 + $0x280] sm:$0xff]
        %v286 = vld [vmem:[%s169 + $0x288] sm:$0xff]
        %v287 = vld [vmem:[%s169 + $0x290] sm:$0xff]
        %v288 = vld [vmem:[%s169 + $0x298] sm:$0xff]
        %v289 = vld [vmem:[%s169 + $0x2a0] sm:$0xff]
        %v290 = vld [vmem:[%s169 + $0x2a8] sm:$0xff]
        %v291 = vld [vmem:[%s169 + $0x2b0] sm:$0xff]
        %v292 = vld [vmem:[%s169 + $0x2b8] sm:$0xff]
        %v293 = vld [vmem:[%s169 + $0x2c0] sm:$0xff]
        %v294 = vld [vmem:[%s169 + $0x2c8] sm:$0xff]
        %v295 = vld [vmem:[%s169 + $0x2d0] sm:$0xff]
        %v296 = vld [vmem:[%s169 + $0x2d8] sm:$0xff]
        %v297 = vld [vmem:[%s169 + $0x2e0] sm:$0xff]
        %v298 = vld [vmem:[%s169 + $0x2e8] sm:$0xff]
        %v299 = vld [vmem:[%s169 + $0x2f0] sm:$0xff]
        %v300 = vld [vmem:[%s169 + $0x2f8] sm:$0xff]
        %v301 = vld [vmem:[%s169 + $0x300] sm:$0xff]
        %v302 = vld [vmem:[%s169 + $0x308] sm:$0xff]
        %v303 = vld [vmem:[%s169 + $0x310] sm:$0xff]
        %v304 = vld [vmem:[%s169 + $0x318] sm:$0xff]
        %v305 = vld [vmem:[%s169 + $0x320] sm:$0xff]
        %v306 = vld [vmem:[%s169 + $0x328] sm:$0xff]
        %v307 = vld [vmem:[%s169 + $0x330] sm:$0xff]
        %v308 = vld [vmem:[%s169 + $0x338] sm:$0xff]
        %v309 = vld [vmem:[%s169 + $0x340] sm:$0xff]
        %v310 = vld [vmem:[%s169 + $0x348] sm:$0xff]
        %v311 = vld [vmem:[%s169 + $0x350] sm:$0xff]
        %v312 = vld [vmem:[%s169 + $0x358] sm:$0xff]
        %v313 = vld [vmem:[%s169 + $0x360] sm:$0xff]
        %v314 = vld [vmem:[%s169 + $0x368] sm:$0xff]
        %v315 = vld [vmem:[%s169 + $0x370] sm:$0xff]
        %v316 = vld [vmem:[%s169 + $0x378] sm:$0xff]
        %v317 = vld [vmem:[%s169 + $0x380] sm:$0xff]
        %v318 = vld [vmem:[%s169 + $0x388] sm:$0xff]
        %v319 = vld [vmem:[%s169 + $0x390] sm:$0xff]
        %v320 = vld [vmem:[%s169 + $0x398] sm:$0xff]
        %v321 = vld [vmem:[%s169 + $0x3a0] sm:$0xff]
        %v322 = vld [vmem:[%s169 + $0x3a8] sm:$0xff]
        %v323 = vld [vmem:[%s169 + $0x3b0] sm:$0xff]
        %v324 = vld [vmem:[%s169 + $0x3b8] sm:$0xff]
        %v325 = vld [vmem:[%s169 + $0x3c0] sm:$0xff]
        %v326 = vld [vmem:[%s169 + $0x3c8] sm:$0xff]
        %v327 = vld [vmem:[%s169 + $0x3d0] sm:$0xff]
        %v328 = vld [vmem:[%s169 + $0x3d8] sm:$0xff]
        %v329 = vld [vmem:[%s169 + $0x3e0] sm:$0xff]
        %v330 = vld [vmem:[%s169 + $0x3e8] sm:$0xff]
        %v331 = vld [vmem:[%s169 + $0x3f0] sm:$0xff]
        %v332 = vld [vmem:[%s169 + $0x3f8] sm:$0xff]
        %v335 = vunpack.c.l.b16 %v203
        %v336 = vunpack.c.l.b16 %v204
        %v337 = vpack.c.b16 %v336, %v335
        %v467 = vunpack.c.l.b16 %v205
        %v468 = vunpack.c.h.b16 %v205
        %v469 = vunpack.c.l.b16 %v206
        %v470 = vunpack.c.h.b16 %v206
        %v471 = vunpack.c.l.b16 %v207
        %v472 = vunpack.c.h.b16 %v207
        %v473 = vunpack.c.l.b16 %v208
        %v474 = vunpack.c.h.b16 %v208
        %v475 = vunpack.c.l.b16 %v209
        %v476 = vunpack.c.h.b16 %v209
        %v477 = vunpack.c.l.b16 %v210
        %v478 = vunpack.c.h.b16 %v210
        %v479 = vunpack.c.l.b16 %v211
        %v480 = vunpack.c.h.b16 %v211
        %v481 = vunpack.c.l.b16 %v212
        %v482 = vunpack.c.h.b16 %v212
        %v483 = vunpack.c.l.b16 %v213
        %v484 = vunpack.c.h.b16 %v213
        %v485 = vunpack.c.l.b16 %v214
        %v486 = vunpack.c.h.b16 %v214
        %v487 = vunpack.c.l.b16 %v215
        %v488 = vunpack.c.h.b16 %v215
        %v489 = vunpack.c.l.b16 %v216
        %v490 = vunpack.c.h.b16 %v216
        %v491 = vunpack.c.l.b16 %v217
        %v492 = vunpack.c.h.b16 %v217
        %v493 = vunpack.c.l.b16 %v218
        %v494 = vunpack.c.h.b16 %v218
        %v495 = vunpack.c.l.b16 %v219
        %v496 = vunpack.c.h.b16 %v219
        %v497 = vunpack.c.l.b16 %v220
        %v498 = vunpack.c.h.b16 %v220
        %v499 = vunpack.c.l.b16 %v221
        %v500 = vunpack.c.h.b16 %v221
        %v501 = vunpack.c.l.b16 %v222
        %v502 = vunpack.c.h.b16 %v222
        %v503 = vunpack.c.l.b16 %v223
        %v504 = vunpack.c.h.b16 %v223
        %v505 = vunpack.c.l.b16 %v224
        %v506 = vunpack.c.h.b16 %v224
        %v507 = vunpack.c.l.b16 %v225
        %v508 = vunpack.c.h.b16 %v225
        %v509 = vunpack.c.l.b16 %v226
        %v510 = vunpack.c.h.b16 %v226
        %v511 = vunpack.c.l.b16 %v227
        %v512 = vunpack.c.h.b16 %v227
        %v513 = vunpack.c.l.b16 %v228
        %v514 = vunpack.c.h.b16 %v228
        %v515 = vunpack.c.l.b16 %v229
        %v516 = vunpack.c.h.b16 %v229
        %v517 = vunpack.c.l.b16 %v230
        %v518 = vunpack.c.h.b16 %v230
        %v519 = vunpack.c.l.b16 %v231
        %v520 = vunpack.c.h.b16 %v231
        %v521 = vunpack.c.l.b16 %v232
        %v522 = vunpack.c.h.b16 %v232
        %v523 = vunpack.c.l.b16 %v233
        %v524 = vunpack.c.h.b16 %v233
        %v525 = vunpack.c.l.b16 %v234
        %v526 = vunpack.c.h.b16 %v234
        %v527 = vunpack.c.l.b16 %v235
        %v528 = vunpack.c.h.b16 %v235
        %v529 = vunpack.c.l.b16 %v236
        %v530 = vunpack.c.h.b16 %v236
        %v531 = vunpack.c.l.b16 %v237
        %v532 = vunpack.c.h.b16 %v237
        %v533 = vunpack.c.l.b16 %v238
        %v534 = vunpack.c.h.b16 %v238
        %v535 = vunpack.c.l.b16 %v239
        %v536 = vunpack.c.h.b16 %v239
        %v537 = vunpack.c.l.b16 %v240
        %v538 = vunpack.c.h.b16 %v240
        %v539 = vunpack.c.l.b16 %v241
        %v540 = vunpack.c.h.b16 %v241
        %v541 = vunpack.c.l.b16 %v242
        %v542 = vunpack.c.h.b16 %v242
        %v543 = vunpack.c.l.b16 %v243
        %v544 = vunpack.c.h.b16 %v243
        %v545 = vunpack.c.l.b16 %v244
        %v546 = vunpack.c.h.b16 %v244
        %v547 = vunpack.c.l.b16 %v245
        %v548 = vunpack.c.h.b16 %v245
        %v549 = vunpack.c.l.b16 %v246
        %v550 = vunpack.c.h.b16 %v246
        %v551 = vunpack.c.l.b16 %v247
        %v552 = vunpack.c.h.b16 %v247
        %v553 = vunpack.c.l.b16 %v248
        %v554 = vunpack.c.h.b16 %v248
        %v555 = vunpack.c.l.b16 %v249
        %v556 = vunpack.c.h.b16 %v249
        %v557 = vunpack.c.l.b16 %v250
        %v558 = vunpack.c.h.b16 %v250
        %v559 = vunpack.c.l.b16 %v251
        %v560 = vunpack.c.h.b16 %v251
        %v561 = vunpack.c.l.b16 %v252
        %v562 = vunpack.c.h.b16 %v252
        %v563 = vunpack.c.l.b16 %v253
        %v564 = vunpack.c.h.b16 %v253
        %v565 = vunpack.c.l.b16 %v254
        %v566 = vunpack.c.h.b16 %v254
        %v567 = vunpack.c.l.b16 %v255
        %v568 = vunpack.c.h.b16 %v255
        %v569 = vunpack.c.l.b16 %v256
        %v570 = vunpack.c.h.b16 %v256
        %v571 = vunpack.c.l.b16 %v257
        %v572 = vunpack.c.h.b16 %v257
        %v573 = vunpack.c.l.b16 %v258
        %v574 = vunpack.c.h.b16 %v258
        %v575 = vunpack.c.l.b16 %v259
        %v576 = vunpack.c.h.b16 %v259
        %v577 = vunpack.c.l.b16 %v260
        %v578 = vunpack.c.h.b16 %v260
        %v579 = vunpack.c.l.b16 %v261
        %v580 = vunpack.c.h.b16 %v261
        %v581 = vunpack.c.l.b16 %v262
        %v582 = vunpack.c.h.b16 %v262
        %v583 = vunpack.c.l.b16 %v263
        %v584 = vunpack.c.h.b16 %v263
        %v585 = vunpack.c.l.b16 %v264
        %v586 = vunpack.c.h.b16 %v264
        %v587 = vunpack.c.l.b16 %v265
        %v588 = vunpack.c.h.b16 %v265
        %v589 = vunpack.c.l.b16 %v266
        %v590 = vunpack.c.h.b16 %v266
        %v591 = vunpack.c.l.b16 %v267
        %v592 = vunpack.c.h.b16 %v267
        %v593 = vunpack.c.l.b16 %v268
        %v594 = vunpack.c.h.b16 %v268
        %v595 = vunpack.c.l.b16 %v269
        %v596 = vunpack.c.h.b16 %v269
        %v597 = vunpack.c.l.b16 %v270
        %v598 = vunpack.c.h.b16 %v270
        %v599 = vunpack.c.l.b16 %v271
        %v600 = vunpack.c.h.b16 %v271
        %v601 = vunpack.c.l.b16 %v272
        %v602 = vunpack.c.h.b16 %v272
        %v603 = vunpack.c.l.b16 %v273
        %v604 = vunpack.c.h.b16 %v273
        %v605 = vunpack.c.l.b16 %v274
        %v606 = vunpack.c.h.b16 %v274
        %v607 = vunpack.c.l.b16 %v275
        %v608 = vunpack.c.h.b16 %v275
        %v609 = vunpack.c.l.b16 %v276
        %v610 = vunpack.c.h.b16 %v276
        %v611 = vunpack.c.l.b16 %v277
        %v612 = vunpack.c.h.b16 %v277
        %v613 = vunpack.c.l.b16 %v278
        %v614 = vunpack.c.h.b16 %v278
        %v615 = vunpack.c.l.b16 %v279
        %v616 = vunpack.c.h.b16 %v279
        %v617 = vunpack.c.l.b16 %v280
        %v618 = vunpack.c.h.b16 %v280
        %v619 = vunpack.c.l.b16 %v281
        %v620 = vunpack.c.h.b16 %v281
        %v621 = vunpack.c.l.b16 %v282
        %v622 = vunpack.c.h.b16 %v282
        %v623 = vunpack.c.l.b16 %v283
        %v624 = vunpack.c.h.b16 %v283
        %v625 = vunpack.c.l.b16 %v284
        %v626 = vunpack.c.h.b16 %v284
        %v627 = vunpack.c.l.b16 %v285
        %v628 = vunpack.c.h.b16 %v285
        %v629 = vunpack.c.l.b16 %v286
        %v630 = vunpack.c.h.b16 %v286
        %v631 = vunpack.c.l.b16 %v287
        %v632 = vunpack.c.h.b16 %v287
        %v633 = vunpack.c.l.b16 %v288
        %v634 = vunpack.c.h.b16 %v288
        %v635 = vunpack.c.l.b16 %v289
        %v636 = vunpack.c.h.b16 %v289
        %v637 = vunpack.c.l.b16 %v290
        %v638 = vunpack.c.h.b16 %v290
        %v639 = vunpack.c.l.b16 %v291
        %v640 = vunpack.c.h.b16 %v291
        %v641 = vunpack.c.l.b16 %v292
        %v642 = vunpack.c.h.b16 %v292
        %v643 = vunpack.c.l.b16 %v293
        %v644 = vunpack.c.h.b16 %v293
        %v645 = vunpack.c.l.b16 %v294
        %v646 = vunpack.c.h.b16 %v294
        %v647 = vunpack.c.l.b16 %v295
        %v648 = vunpack.c.h.b16 %v295
        %v649 = vunpack.c.l.b16 %v296
        %v650 = vunpack.c.h.b16 %v296
        %v651 = vunpack.c.l.b16 %v297
        %v652 = vunpack.c.h.b16 %v297
        %v653 = vunpack.c.l.b16 %v298
        %v654 = vunpack.c.h.b16 %v298
        %v655 = vunpack.c.l.b16 %v299
        %v656 = vunpack.c.h.b16 %v299
        %v657 = vunpack.c.l.b16 %v300
        %v658 = vunpack.c.h.b16 %v300
        %v659 = vunpack.c.l.b16 %v301
        %v660 = vunpack.c.h.b16 %v301
        %v661 = vunpack.c.l.b16 %v302
        %v662 = vunpack.c.h.b16 %v302
        %v663 = vunpack.c.l.b16 %v303
        %v664 = vunpack.c.h.b16 %v303
        %v665 = vunpack.c.l.b16 %v304
        %v666 = vunpack.c.h.b16 %v304
        %v667 = vunpack.c.l.b16 %v305
        %v668 = vunpack.c.h.b16 %v305
        %v669 = vunpack.c.l.b16 %v306
        %v670 = vunpack.c.h.b16 %v306
        %v671 = vunpack.c.l.b16 %v307
        %v672 = vunpack.c.h.b16 %v307
        %v673 = vunpack.c.l.b16 %v308
        %v674 = vunpack.c.h.b16 %v308
        %v675 = vunpack.c.l.b16 %v309
        %v676 = vunpack.c.h.b16 %v309
        %v677 = vunpack.c.l.b16 %v310
        %v678 = vunpack.c.h.b16 %v310
        %v679 = vunpack.c.l.b16 %v311
        %v680 = vunpack.c.h.b16 %v311
        %v681 = vunpack.c.l.b16 %v312
        %v682 = vunpack.c.h.b16 %v312
        %v683 = vunpack.c.l.b16 %v313
        %v684 = vunpack.c.h.b16 %v313
        %v685 = vunpack.c.l.b16 %v314
        %v686 = vunpack.c.h.b16 %v314
        %v687 = vunpack.c.l.b16 %v315
        %v688 = vunpack.c.h.b16 %v315
        %v689 = vunpack.c.l.b16 %v316
        %v690 = vunpack.c.h.b16 %v316
        %v691 = vunpack.c.l.b16 %v317
        %v692 = vunpack.c.h.b16 %v317
        %v693 = vunpack.c.l.b16 %v318
        %v694 = vunpack.c.h.b16 %v318
        %v695 = vunpack.c.l.b16 %v319
        %v696 = vunpack.c.h.b16 %v319
        %v697 = vunpack.c.l.b16 %v320
        %v698 = vunpack.c.h.b16 %v320
        %v699 = vunpack.c.l.b16 %v321
        %v700 = vunpack.c.h.b16 %v321
        %v701 = vunpack.c.l.b16 %v322
        %v702 = vunpack.c.h.b16 %v322
        %v703 = vunpack.c.l.b16 %v323
        %v704 = vunpack.c.h.b16 %v323
        %v705 = vunpack.c.l.b16 %v324
        %v706 = vunpack.c.h.b16 %v324
        %v707 = vunpack.c.l.b16 %v325
        %v708 = vunpack.c.h.b16 %v325
        %v709 = vunpack.c.l.b16 %v326
        %v710 = vunpack.c.h.b16 %v326
        %v711 = vunpack.c.l.b16 %v327
        %v712 = vunpack.c.h.b16 %v327
        %v713 = vunpack.c.l.b16 %v328
        %v714 = vunpack.c.h.b16 %v328
        %v715 = vunpack.c.l.b16 %v329
        %v716 = vunpack.c.h.b16 %v329
        %v717 = vunpack.c.l.b16 %v330
        %v718 = vunpack.c.h.b16 %v330
        %v719 = vunpack.c.l.b16 %v331
        %v720 = vunpack.c.h.b16 %v331
        %v721 = vunpack.c.l.b16 %v332
        %v722 = vunpack.c.h.b16 %v332
        %v723 = vpack.c.b16 %v483, %v467
        %v724 = vpack.c.b16 %v484, %v468
        %v725 = vpack.c.b16 %v485, %v469
        %v726 = vpack.c.b16 %v486, %v470
        %v727 = vpack.c.b16 %v487, %v471
        %v728 = vpack.c.b16 %v488, %v472
        %v729 = vpack.c.b16 %v489, %v473
        %v730 = vpack.c.b16 %v490, %v474
        %v731 = vpack.c.b16 %v491, %v475
        %v732 = vpack.c.b16 %v492, %v476
        %v733 = vpack.c.b16 %v493, %v477
        %v734 = vpack.c.b16 %v494, %v478
        %v735 = vpack.c.b16 %v495, %v479
        %v736 = vpack.c.b16 %v496, %v480
        %v737 = vpack.c.b16 %v497, %v481
        %v738 = vpack.c.b16 %v498, %v482
        %v739 = vpack.c.b16 %v515, %v499
        %v740 = vpack.c.b16 %v516, %v500
        %v741 = vpack.c.b16 %v517, %v501
        %v742 = vpack.c.b16 %v518, %v502
        %v743 = vpack.c.b16 %v519, %v503
        %v744 = vpack.c.b16 %v520, %v504
        %v745 = vpack.c.b16 %v521, %v505
        %v746 = vpack.c.b16 %v522, %v506
        %v747 = vpack.c.b16 %v523, %v507
        %v748 = vpack.c.b16 %v524, %v508
        %v749 = vpack.c.b16 %v525, %v509
        %v750 = vpack.c.b16 %v526, %v510
        %v751 = vpack.c.b16 %v527, %v511
        %v752 = vpack.c.b16 %v528, %v512
        %v753 = vpack.c.b16 %v529, %v513
        %v754 = vpack.c.b16 %v530, %v514
        %v755 = vpack.c.b16 %v547, %v531
        %v756 = vpack.c.b16 %v548, %v532
        %v757 = vpack.c.b16 %v549, %v533
        %v758 = vpack.c.b16 %v550, %v534
        %v759 = vpack.c.b16 %v551, %v535
        %v760 = vpack.c.b16 %v552, %v536
        %v761 = vpack.c.b16 %v553, %v537
        %v762 = vpack.c.b16 %v554, %v538
        %v763 = vpack.c.b16 %v555, %v539
        %v764 = vpack.c.b16 %v556, %v540
        %v765 = vpack.c.b16 %v557, %v541
        %v766 = vpack.c.b16 %v558, %v542
        %v767 = vpack.c.b16 %v559, %v543
        %v768 = vpack.c.b16 %v560, %v544
        %v769 = vpack.c.b16 %v561, %v545
        %v770 = vpack.c.b16 %v562, %v546
        %v771 = vpack.c.b16 %v579, %v563
        %v772 = vpack.c.b16 %v580, %v564
        %v773 = vpack.c.b16 %v581, %v565
        %v774 = vpack.c.b16 %v582, %v566
        %v775 = vpack.c.b16 %v583, %v567
        %v776 = vpack.c.b16 %v584, %v568
        %v777 = vpack.c.b16 %v585, %v569
        %v778 = vpack.c.b16 %v586, %v570
        %v779 = vpack.c.b16 %v587, %v571
        %v780 = vpack.c.b16 %v588, %v572
        %v781 = vpack.c.b16 %v589, %v573
        %v782 = vpack.c.b16 %v590, %v574
        %v783 = vpack.c.b16 %v591, %v575
        %v784 = vpack.c.b16 %v592, %v576
        %v785 = vpack.c.b16 %v593, %v577
        %v786 = vpack.c.b16 %v594, %v578
        %v787 = vpack.c.b16 %v611, %v595
        %v788 = vpack.c.b16 %v612, %v596
        %v789 = vpack.c.b16 %v613, %v597
        %v790 = vpack.c.b16 %v614, %v598
        %v791 = vpack.c.b16 %v615, %v599
        %v792 = vpack.c.b16 %v616, %v600
        %v793 = vpack.c.b16 %v617, %v601
        %v794 = vpack.c.b16 %v618, %v602
        %v795 = vpack.c.b16 %v619, %v603
        %v796 = vpack.c.b16 %v620, %v604
        %v797 = vpack.c.b16 %v621, %v605
        %v798 = vpack.c.b16 %v622, %v606
        %v799 = vpack.c.b16 %v623, %v607
        %v800 = vpack.c.b16 %v624, %v608
        %v801 = vpack.c.b16 %v625, %v609
        %v802 = vpack.c.b16 %v626, %v610
        %v803 = vpack.c.b16 %v643, %v627
        %v804 = vpack.c.b16 %v644, %v628
        %v805 = vpack.c.b16 %v645, %v629
        %v806 = vpack.c.b16 %v646, %v630
        %v807 = vpack.c.b16 %v647, %v631
        %v808 = vpack.c.b16 %v648, %v632
        %v809 = vpack.c.b16 %v649, %v633
        %v810 = vpack.c.b16 %v650, %v634
        %v811 = vpack.c.b16 %v651, %v635
        %v812 = vpack.c.b16 %v652, %v636
        %v813 = vpack.c.b16 %v653, %v637
        %v814 = vpack.c.b16 %v654, %v638
        %v815 = vpack.c.b16 %v655, %v639
        %v816 = vpack.c.b16 %v656, %v640
        %v817 = vpack.c.b16 %v657, %v641
        %v818 = vpack.c.b16 %v658, %v642
        %v819 = vpack.c.b16 %v675, %v659
        %v820 = vpack.c.b16 %v676, %v660
        %v821 = vpack.c.b16 %v677, %v661
        %v822 = vpack.c.b16 %v678, %v662
        %v823 = vpack.c.b16 %v679, %v663
        %v824 = vpack.c.b16 %v680, %v664
        %v825 = vpack.c.b16 %v681, %v665
        %v826 = vpack.c.b16 %v682, %v666
        %v827 = vpack.c.b16 %v683, %v667
        %v828 = vpack.c.b16 %v684, %v668
        %v829 = vpack.c.b16 %v685, %v669
        %v830 = vpack.c.b16 %v686, %v670
        %v831 = vpack.c.b16 %v687, %v671
        %v832 = vpack.c.b16 %v688, %v672
        %v833 = vpack.c.b16 %v689, %v673
        %v834 = vpack.c.b16 %v690, %v674
        %v835 = vpack.c.b16 %v707, %v691
        %v836 = vpack.c.b16 %v708, %v692
        %v837 = vpack.c.b16 %v709, %v693
        %v838 = vpack.c.b16 %v710, %v694
        %v839 = vpack.c.b16 %v711, %v695
        %v840 = vpack.c.b16 %v712, %v696
        %v841 = vpack.c.b16 %v713, %v697
        %v842 = vpack.c.b16 %v714, %v698
        %v843 = vpack.c.b16 %v715, %v699
        %v844 = vpack.c.b16 %v716, %v700
        %v845 = vpack.c.b16 %v717, %v701
        %v846 = vpack.c.b16 %v718, %v702
        %v847 = vpack.c.b16 %v719, %v703
        %v848 = vpack.c.b16 %v720, %v704
        %v849 = vpack.c.b16 %v721, %v705
        %v850 = vpack.c.b16 %v722, %v706
        %979 = vmatpush.bf16.msra.mxu0 %v835
        %980 = vmatpush.bf16.msra.mxu0 %v819
        %981 = vmatpush.bf16.msra.mxu0 %v803
        %982 = vmatpush.bf16.msra.mxu0 %v787
        %983 = vmatpush.bf16.msra.mxu0 %v771
        %984 = vmatpush.bf16.msra.mxu0 %v755
        %985 = vmatpush.bf16.msra.mxu0 %v739
        %986 = vmatpush.bf16.msra.mxu0 %v723
        %987 = vmatmul.bf16.gmra.mxu0 %v337
        %v988 = vpop.f32.mrf.mxu0
        %v989 = vadd.f32 0.0, %v988
        %v990 = vpop.f32.mrf.mxu0
        %v991 = vadd.f32 0.0, %v990
        %992 = vdwg.mxu0
        %993 = vmatpush.bf16.msra.mxu0 %v836
        %994 = vmatpush.bf16.msra.mxu0 %v820
        %995 = vmatpush.bf16.msra.mxu0 %v804
        %996 = vmatpush.bf16.msra.mxu0 %v788
        %997 = vmatpush.bf16.msra.mxu0 %v772
        %998 = vmatpush.bf16.msra.mxu0 %v756
        %999 = vmatpush.bf16.msra.mxu0 %v740
        %1000 = vmatpush.bf16.msra.mxu0 %v724
        %1001 = vmatmul.bf16.gmra.mxu0 %v337
        %v1002 = vpop.f32.mrf.mxu0
        %v1003 = vadd.f32 0.0, %v1002
        %v1004 = vpop.f32.mrf.mxu0
        %v1005 = vadd.f32 0.0, %v1004
        %1006 = vdwg.mxu0
        %1007 = vmatpush.bf16.msra.mxu0 %v837
        %1008 = vmatpush.bf16.msra.mxu0 %v821
        %1009 = vmatpush.bf16.msra.mxu0 %v805
        %1010 = vmatpush.bf16.msra.mxu0 %v789
        %1011 = vmatpush.bf16.msra.mxu0 %v773
        %1012 = vmatpush.bf16.msra.mxu0 %v757
        %1013 = vmatpush.bf16.msra.mxu0 %v741
        %1014 = vmatpush.bf16.msra.mxu0 %v725
        %1015 = vmatmul.bf16.gmra.mxu0 %v337
        %v1016 = vpop.f32.mrf.mxu0
        %v1017 = vadd.f32 0.0, %v1016
        %v1018 = vpop.f32.mrf.mxu0
        %v1019 = vadd.f32 0.0, %v1018
        %1020 = vdwg.mxu0
        %1021 = vmatpush.bf16.msra.mxu0 %v838
        %1022 = vmatpush.bf16.msra.mxu0 %v822
        %1023 = vmatpush.bf16.msra.mxu0 %v806
        %1024 = vmatpush.bf16.msra.mxu0 %v790
        %1025 = vmatpush.bf16.msra.mxu0 %v774
        %1026 = vmatpush.bf16.msra.mxu0 %v758
        %1027 = vmatpush.bf16.msra.mxu0 %v742
        %1028 = vmatpush.bf16.msra.mxu0 %v726
        %1029 = vmatmul.bf16.gmra.mxu0 %v337
        %v1030 = vpop.f32.mrf.mxu0
        %v1031 = vadd.f32 0.0, %v1030
        %v1032 = vpop.f32.mrf.mxu0
        %v1033 = vadd.f32 0.0, %v1032
        %1034 = vdwg.mxu0
        %1035 = vmatpush.bf16.msra.mxu0 %v839
        %1036 = vmatpush.bf16.msra.mxu0 %v823
        %1037 = vmatpush.bf16.msra.mxu0 %v807
        %1038 = vmatpush.bf16.msra.mxu0 %v791
        %1039 = vmatpush.bf16.msra.mxu0 %v775
        %1040 = vmatpush.bf16.msra.mxu0 %v759
        %1041 = vmatpush.bf16.msra.mxu0 %v743
        %1042 = vmatpush.bf16.msra.mxu0 %v727
        %1043 = vmatmul.bf16.gmra.mxu0 %v337
        %v1044 = vpop.f32.mrf.mxu0
        %v1045 = vadd.f32 0.0, %v1044
        %v1046 = vpop.f32.mrf.mxu0
        %v1047 = vadd.f32 0.0, %v1046
        %1048 = vdwg.mxu0
        %1049 = vmatpush.bf16.msra.mxu0 %v840
        %1050 = vmatpush.bf16.msra.mxu0 %v824
        %1051 = vmatpush.bf16.msra.mxu0 %v808
        %1052 = vmatpush.bf16.msra.mxu0 %v792
        %1053 = vmatpush.bf16.msra.mxu0 %v776
        %1054 = vmatpush.bf16.msra.mxu0 %v760
        %1055 = vmatpush.bf16.msra.mxu0 %v744
        %1056 = vmatpush.bf16.msra.mxu0 %v728
        %1057 = vmatmul.bf16.gmra.mxu0 %v337
        %v1058 = vpop.f32.mrf.mxu0
        %v1059 = vadd.f32 0.0, %v1058
        %v1060 = vpop.f32.mrf.mxu0
        %v1061 = vadd.f32 0.0, %v1060
        %1062 = vdwg.mxu0
        %1063 = vmatpush.bf16.msra.mxu0 %v841
        %1064 = vmatpush.bf16.msra.mxu0 %v825
        %1065 = vmatpush.bf16.msra.mxu0 %v809
        %1066 = vmatpush.bf16.msra.mxu0 %v793
        %1067 = vmatpush.bf16.msra.mxu0 %v777
        %1068 = vmatpush.bf16.msra.mxu0 %v761
        %1069 = vmatpush.bf16.msra.mxu0 %v745
        %1070 = vmatpush.bf16.msra.mxu0 %v729
        %1071 = vmatmul.bf16.gmra.mxu0 %v337
        %v1072 = vpop.f32.mrf.mxu0
        %v1073 = vadd.f32 0.0, %v1072
        %v1074 = vpop.f32.mrf.mxu0
        %v1075 = vadd.f32 0.0, %v1074
        %1076 = vdwg.mxu0
        %1077 = vmatpush.bf16.msra.mxu0 %v842
        %1078 = vmatpush.bf16.msra.mxu0 %v826
        %1079 = vmatpush.bf16.msra.mxu0 %v810
        %1080 = vmatpush.bf16.msra.mxu0 %v794
        %1081 = vmatpush.bf16.msra.mxu0 %v778
        %1082 = vmatpush.bf16.msra.mxu0 %v762
        %1083 = vmatpush.bf16.msra.mxu0 %v746
        %1084 = vmatpush.bf16.msra.mxu0 %v730
        %1085 = vmatmul.bf16.gmra.mxu0 %v337
        %v1086 = vpop.f32.mrf.mxu0
        %v1087 = vadd.f32 0.0, %v1086
        %v1088 = vpop.f32.mrf.mxu0
        %v1089 = vadd.f32 0.0, %v1088
        %1090 = vdwg.mxu0
        %1091 = vmatpush.bf16.msra.mxu0 %v843
        %1092 = vmatpush.bf16.msra.mxu0 %v827
        %1093 = vmatpush.bf16.msra.mxu0 %v811
        %1094 = vmatpush.bf16.msra.mxu0 %v795
        %1095 = vmatpush.bf16.msra.mxu0 %v779
        %1096 = vmatpush.bf16.msra.mxu0 %v763
        %1097 = vmatpush.bf16.msra.mxu0 %v747
        %1098 = vmatpush.bf16.msra.mxu0 %v731
        %1099 = vmatmul.bf16.gmra.mxu0 %v337
        %v1100 = vpop.f32.mrf.mxu0
        %v1101 = vadd.f32 0.0, %v1100
        %v1102 = vpop.f32.mrf.mxu0
        %v1103 = vadd.f32 0.0, %v1102
        %1104 = vdwg.mxu0
        %1105 = vmatpush.bf16.msra.mxu0 %v844
        %1106 = vmatpush.bf16.msra.mxu0 %v828
        %1107 = vmatpush.bf16.msra.mxu0 %v812
        %1108 = vmatpush.bf16.msra.mxu0 %v796
        %1109 = vmatpush.bf16.msra.mxu0 %v780
        %1110 = vmatpush.bf16.msra.mxu0 %v764
        %1111 = vmatpush.bf16.msra.mxu0 %v748
        %1112 = vmatpush.bf16.msra.mxu0 %v732
        %1113 = vmatmul.bf16.gmra.mxu0 %v337
        %v1114 = vpop.f32.mrf.mxu0
        %v1115 = vadd.f32 0.0, %v1114
        %v1116 = vpop.f32.mrf.mxu0
        %v1117 = vadd.f32 0.0, %v1116
        %1118 = vdwg.mxu0
        %1119 = vmatpush.bf16.msra.mxu0 %v845
        %1120 = vmatpush.bf16.msra.mxu0 %v829
        %1121 = vmatpush.bf16.msra.mxu0 %v813
        %1122 = vmatpush.bf16.msra.mxu0 %v797
        %1123 = vmatpush.bf16.msra.mxu0 %v781
        %1124 = vmatpush.bf16.msra.mxu0 %v765
        %1125 = vmatpush.bf16.msra.mxu0 %v749
        %1126 = vmatpush.bf16.msra.mxu0 %v733
        %1127 = vmatmul.bf16.gmra.mxu0 %v337
        %v1128 = vpop.f32.mrf.mxu0
        %v1129 = vadd.f32 0.0, %v1128
        %v1130 = vpop.f32.mrf.mxu0
        %v1131 = vadd.f32 0.0, %v1130
        %1132 = vdwg.mxu0
        %1133 = vmatpush.bf16.msra.mxu0 %v846
        %1134 = vmatpush.bf16.msra.mxu0 %v830
        %1135 = vmatpush.bf16.msra.mxu0 %v814
        %1136 = vmatpush.bf16.msra.mxu0 %v798
        %1137 = vmatpush.bf16.msra.mxu0 %v782
        %1138 = vmatpush.bf16.msra.mxu0 %v766
        %1139 = vmatpush.bf16.msra.mxu0 %v750
        %1140 = vmatpush.bf16.msra.mxu0 %v734
        %1141 = vmatmul.bf16.gmra.mxu0 %v337
        %v1142 = vpop.f32.mrf.mxu0
        %v1143 = vadd.f32 0.0, %v1142
        %v1144 = vpop.f32.mrf.mxu0
        %v1145 = vadd.f32 0.0, %v1144
        %1146 = vdwg.mxu0
        %1147 = vmatpush.bf16.msra.mxu0 %v847
        %1148 = vmatpush.bf16.msra.mxu0 %v831
        %1149 = vmatpush.bf16.msra.mxu0 %v815
        %1150 = vmatpush.bf16.msra.mxu0 %v799
        %1151 = vmatpush.bf16.msra.mxu0 %v783
        %1152 = vmatpush.bf16.msra.mxu0 %v767
        %1153 = vmatpush.bf16.msra.mxu0 %v751
        %1154 = vmatpush.bf16.msra.mxu0 %v735
        %1155 = vmatmul.bf16.gmra.mxu0 %v337
        %v1156 = vpop.f32.mrf.mxu0
        %v1157 = vadd.f32 0.0, %v1156
        %v1158 = vpop.f32.mrf.mxu0
        %v1159 = vadd.f32 0.0, %v1158
        %1160 = vdwg.mxu0
        %1161 = vmatpush.bf16.msra.mxu0 %v848
        %1162 = vmatpush.bf16.msra.mxu0 %v832
        %1163 = vmatpush.bf16.msra.mxu0 %v816
        %1164 = vmatpush.bf16.msra.mxu0 %v800
        %1165 = vmatpush.bf16.msra.mxu0 %v784
        %1166 = vmatpush.bf16.msra.mxu0 %v768
        %1167 = vmatpush.bf16.msra.mxu0 %v752
        %1168 = vmatpush.bf16.msra.mxu0 %v736
        %1169 = vmatmul.bf16.gmra.mxu0 %v337
        %v1170 = vpop.f32.mrf.mxu0
        %v1171 = vadd.f32 0.0, %v1170
        %v1172 = vpop.f32.mrf.mxu0
        %v1173 = vadd.f32 0.0, %v1172
        %1174 = vdwg.mxu0
        %1175 = vmatpush.bf16.msra.mxu0 %v849
        %1176 = vmatpush.bf16.msra.mxu0 %v833
        %1177 = vmatpush.bf16.msra.mxu0 %v817
        %1178 = vmatpush.bf16.msra.mxu0 %v801
        %1179 = vmatpush.bf16.msra.mxu0 %v785
        %1180 = vmatpush.bf16.msra.mxu0 %v769
        %1181 = vmatpush.bf16.msra.mxu0 %v753
        %1182 = vmatpush.bf16.msra.mxu0 %v737
        %1183 = vmatmul.bf16.gmra.mxu0 %v337
        %v1184 = vpop.f32.mrf.mxu0
        %v1185 = vadd.f32 0.0, %v1184
        %v1186 = vpop.f32.mrf.mxu0
        %v1187 = vadd.f32 0.0, %v1186
        %1188 = vdwg.mxu0
        %1189 = vmatpush.bf16.msra.mxu0 %v850
        %1190 = vmatpush.bf16.msra.mxu0 %v834
        %1191 = vmatpush.bf16.msra.mxu0 %v818
        %1192 = vmatpush.bf16.msra.mxu0 %v802
        %1193 = vmatpush.bf16.msra.mxu0 %v786
        %1194 = vmatpush.bf16.msra.mxu0 %v770
        %1195 = vmatpush.bf16.msra.mxu0 %v754
        %1196 = vmatpush.bf16.msra.mxu0 %v738
        %1197 = vmatmul.bf16.gmra.mxu0 %v337
        %v1198 = vpop.f32.mrf.mxu0
        %v1199 = vadd.f32 0.0, %v1198
        %v1200 = vpop.f32.mrf.mxu0
        %v1201 = vadd.f32 0.0, %v1200
        %1202 = vdwg.mxu0
        %v1203 = vld [vmem:[%s2] sm:$0xff]
        %v1204 = vld [vmem:[%s2 + $0x8] sm:$0xff]
        %v1205 = vadd.f32 %v989, %v1003
        %v1206 = vadd.f32 %v1205, %v1017
        %v1207 = vadd.f32 %v1206, %v1031
        %v1208 = vadd.f32 %v1207, %v1045
        %v1209 = vadd.f32 %v1208, %v1059
        %v1210 = vadd.f32 %v1209, %v1073
        %v1211 = vadd.f32 %v1210, %v1087
        %v1212 = vadd.f32 %v1211, %v1101
        %v1213 = vadd.f32 %v1212, %v1115
        %v1214 = vadd.f32 %v1213, %v1129
        %v1215 = vadd.f32 %v1214, %v1143
        %v1216 = vadd.f32 %v1215, %v1157
        %v1217 = vadd.f32 %v1216, %v1171
        %v1218 = vadd.f32 %v1217, %v1185
        %v1219 = vadd.f32 %v1218, %v1199
        %1220 = vadd.xlane.f32.xlu0 %v1219
        %v1221 = vpop.xlane.xlu0 %1220
        %v1222 = vadd.f32 %v991, %v1005
        %v1223 = vadd.f32 %v1222, %v1019
        %v1224 = vadd.f32 %v1223, %v1033
        %v1225 = vadd.f32 %v1224, %v1047
        %v1226 = vadd.f32 %v1225, %v1061
        %v1227 = vadd.f32 %v1226, %v1075
        %v1228 = vadd.f32 %v1227, %v1089
        %v1229 = vadd.f32 %v1228, %v1103
        %v1230 = vadd.f32 %v1229, %v1117
        %v1231 = vadd.f32 %v1230, %v1131
        %v1232 = vadd.f32 %v1231, %v1145
        %v1233 = vadd.f32 %v1232, %v1159
        %v1234 = vadd.f32 %v1233, %v1173
        %v1235 = vadd.f32 %v1234, %v1187
        %v1236 = vadd.f32 %v1235, %v1201
        %1237 = vadd.xlane.f32.xlu0 %v1236
        %v1238 = vpop.xlane.xlu0 %1237
        %v1239 = vadd.f32 %v1203, %v1221
        %v1240 = vadd.f32 %v1204, %v1238
        %vm1241 = vcmask 7168
        %1242 = vst.msk [vmem:[%s2] sm:$0xff] %vm1241, %v1239
        %1243 = vst.msk [vmem:[%s2 + $0x8] sm:$0xff] %vm1241, %v1240
        %v1244 = vld [vmem:[%s3] sm:$0xff]
        %v1245 = vld [vmem:[%s3 + $0x8] sm:$0xff]
        %v1246 = vmul.f32 %v989, %v989
        %v1247 = vmul.f32 %v1003, %v1003
        %v1248 = vmul.f32 %v1017, %v1017
        %v1249 = vmul.f32 %v1031, %v1031
        %v1250 = vmul.f32 %v1045, %v1045
        %v1251 = vmul.f32 %v1059, %v1059
        %v1252 = vmul.f32 %v1073, %v1073
        %v1253 = vmul.f32 %v1087, %v1087
        %v1254 = vmul.f32 %v1101, %v1101
        %v1255 = vmul.f32 %v1115, %v1115
        %v1256 = vmul.f32 %v1129, %v1129
        %v1257 = vmul.f32 %v1143, %v1143
        %v1258 = vmul.f32 %v1157, %v1157
        %v1259 = vmul.f32 %v1171, %v1171
        %v1260 = vmul.f32 %v1185, %v1185
        %v1261 = vmul.f32 %v1199, %v1199
        %v1262 = vmul.f32 %v991, %v991
        %v1263 = vmul.f32 %v1005, %v1005
        %v1264 = vmul.f32 %v1019, %v1019
        %v1265 = vmul.f32 %v1033, %v1033
        %v1266 = vmul.f32 %v1047, %v1047
        %v1267 = vmul.f32 %v1061, %v1061
        %v1268 = vmul.f32 %v1075, %v1075
        %v1269 = vmul.f32 %v1089, %v1089
        %v1270 = vmul.f32 %v1103, %v1103
        %v1271 = vmul.f32 %v1117, %v1117
        %v1272 = vmul.f32 %v1131, %v1131
        %v1273 = vmul.f32 %v1145, %v1145
        %v1274 = vmul.f32 %v1159, %v1159
        %v1275 = vmul.f32 %v1173, %v1173
        %v1276 = vmul.f32 %v1187, %v1187
        %v1277 = vmul.f32 %v1201, %v1201
        %v1278 = vadd.f32 %v1246, %v1247
        %v1279 = vadd.f32 %v1278, %v1248
        %v1280 = vadd.f32 %v1279, %v1249
        %v1281 = vadd.f32 %v1280, %v1250
        %v1282 = vadd.f32 %v1281, %v1251
        %v1283 = vadd.f32 %v1282, %v1252
        %v1284 = vadd.f32 %v1283, %v1253
        %v1285 = vadd.f32 %v1284, %v1254
        %v1286 = vadd.f32 %v1285, %v1255
        %v1287 = vadd.f32 %v1286, %v1256
        %v1288 = vadd.f32 %v1287, %v1257
        %v1289 = vadd.f32 %v1288, %v1258
        %v1290 = vadd.f32 %v1289, %v1259
        %v1291 = vadd.f32 %v1290, %v1260
        %v1292 = vadd.f32 %v1291, %v1261
        %1293 = vadd.xlane.f32.xlu0 %v1292
        %v1294 = vpop.xlane.xlu0 %1293
        %v1295 = vadd.f32 %v1262, %v1263
        %v1296 = vadd.f32 %v1295, %v1264
        %v1297 = vadd.f32 %v1296, %v1265
        %v1298 = vadd.f32 %v1297, %v1266
        %v1299 = vadd.f32 %v1298, %v1267
        %v1300 = vadd.f32 %v1299, %v1268
        %v1301 = vadd.f32 %v1300, %v1269
        %v1302 = vadd.f32 %v1301, %v1270
        %v1303 = vadd.f32 %v1302, %v1271
        %v1304 = vadd.f32 %v1303, %v1272
        %v1305 = vadd.f32 %v1304, %v1273
        %v1306 = vadd.f32 %v1305, %v1274
        %v1307 = vadd.f32 %v1306, %v1275
        %v1308 = vadd.f32 %v1307, %v1276
        %v1309 = vadd.f32 %v1308, %v1277
        %1310 = vadd.xlane.f32.xlu0 %v1309
        %v1311 = vpop.xlane.xlu0 %1310
        %v1312 = vadd.f32 %v1244, %v1294
        %v1313 = vadd.f32 %v1245, %v1311
        %1314 = vst.msk [vmem:[%s3] sm:$0xff] %vm1241, %v1312
        %1315 = vst.msk [vmem:[%s3 + $0x8] sm:$0xff] %vm1241, %v1313
        // Predicated region
        $region41: #{tpu_custom_call.1} parent=27 // pred_check
          %p1316 = pneg %p79
        $region42: #{tpu_custom_call.1} parent=27 // pred_check_branch
          %1318 = sbr.rel (%p1316) target = $region44
        $region43: #{tpu_custom_call.1} parent=27 // pred_region
          _
        $region44: #{tpu_custom_call.1} parent=27 // pred_fallthru
          _
        // Predicated region
        $region45: #{tpu_custom_call.1} parent=27 // pred_check
          %p1319 = pneg %p100
        $region46: #{tpu_custom_call.1} parent=27 // pred_check_branch
          %1321 = sbr.rel (%p1319) target = $region48
        $region47: #{tpu_custom_call.1} parent=27 // pred_region
          _
        $region48: #{tpu_custom_call.1} parent=27 // pred_fallthru
          _
        // Predicated region
        $region49: #{tpu_custom_call.1} parent=27 // pred_check
          %p1322 = pneg %p79
        $region50: #{tpu_custom_call.1} parent=27 // pred_check_branch
          %1324 = sbr.rel (%p1322) target = $region52
        $region51: #{tpu_custom_call.1} parent=27 // pred_region
          _
        $region52: #{tpu_custom_call.1} parent=27 // pred_fallthru
          _
        // Predicated region
        $region53: #{tpu_custom_call.1} parent=27 // pred_check
          %p1325 = pneg %p100
        $region54: #{tpu_custom_call.1} parent=27 // pred_check_branch
          %1327 = sbr.rel (%p1325) target = $region56
        $region55: #{tpu_custom_call.1} parent=27 // pred_region
          _
        $region56: #{tpu_custom_call.1} parent=27 // pred_fallthru
          _
      $region28: #{tpu_custom_call.1} parent=5 // pred_fallthru
        _
      %p1328 = scmp.le.s32.totalorder 2, %s14
      // Predicated region
      $region57: #{tpu_custom_call.1} parent=5 // pred_check
        %p1329 = pneg %p1328
      $region58: #{tpu_custom_call.1} parent=5 // pred_check_branch
        %1331 = sbr.rel (%p1329) target = $region60
      $region59: #{tpu_custom_call.1} parent=5 // pred_region
        %s1332 = ssub.s32 %s14, 2
      $region60: #{tpu_custom_call.1} parent=5 // pred_fallthru
        _
    $region6: #{tpu_custom_call.1} parent=1 // loop_footer
      %s18 = sadd.s32 1, %s14
    $region7: #{tpu_custom_call.1} parent=1 // loop_footer_branch
      %13 = sbr.rel target = $region3
    $region8: #{tpu_custom_call.1} parent=1 // loop_exit
      _
    %1333 = vsyncpa [#allocation3], 1
    %s1334 = scalar_lea.sflag [#allocation3], 1
    %1335 = vsyncpa %s1334, 1
    %1336 = vsyncpa [#allocation5], 1

</llo_original>
